<compile_context>
chip_gen: v5e
topology: v5e:2x2
jax: 0.10.0
libtpu: 0.0.40
codegen_flags: <defaults>
</compile_context>

<pallas_src>
import jax
import jax.numpy as jnp
from jax import lax
from jax.experimental import pallas as pl
from jax.experimental.pallas import tpu as pltpu

EPS = 1e-5
LANE = 128
SUBLANE = 8


def _round_up(x, m):
    return (x + m - 1) // m * m


def _round_down(x, m):
    return (x // m) * m


def _hw_params():
    """Per-generation VMEM budgets and TensorCore count, with safe fallbacks."""
    vmem_cap = 64 * 1024 * 1024          # v7x worst case
    n_cores = 1
    try:
        info = pltpu.get_tpu_info()
        cap = getattr(info, "vmem_capacity_bytes", None)
        if cap:
            vmem_cap = int(cap)
        for name in ("num_cores", "num_tensorcores", "tensorcores_per_chip",
                     "cores_per_chip", "core_count"):
            v = getattr(info, name, None)
            if v is not None:
                try:
                    n_cores = max(1, min(int(v), 2))
                    break
                except Exception:
                    pass
    except Exception:
        pass
    vmem_limit = min(int(vmem_cap * 0.75), 100 * 1024 * 1024)
    tile_budget = min(int(vmem_cap * 0.45), 56 * 1024 * 1024)
    return tile_budget, vmem_limit, n_cores


def _plan_pass1(m_rows, k_pad, cout_pad, budget, n_cores):
    """Pick (tile_m, tile_k). Full-K weight residency is preferred; K is split
    only when the resident weight block would squeeze tile_m below a healthy
    MXU tile (keeps tile_m large for deep layers instead of collapsing to 8)."""
    m_cap = _round_up(max(1, pl.cdiv(m_rows, n_cores)), SUBLANE)
    k_cands = [k_pad]
    while k_cands[-1] % 2 == 0 and (k_cands[-1] // 2) % LANE == 0:
        k_cands.append(k_cands[-1] // 2)

    tile_m, tile_k = SUBLANE, k_cands[-1]
    for tk in k_cands:
        fixed = 2 * (tk * cout_pad * 2) + 4 * (SUBLANE * cout_pad * 4)   # dbl-buf bf16 weights + stats
        per_row = 2 * (tk * 2) + 2 * (cout_pad * 2) + cout_pad * 4       # dbl bf16 patches + dbl bf16 conv + f32 acc
        avail = budget - fixed
        if avail <= per_row * SUBLANE:
            continue
        tm = min(avail // per_row, 1024, m_cap)
        tile_m, tile_k = tm, tk
        if tm >= min(512, m_cap):
            break
    if tile_m >= 256:                     # 256x256 MXU on v6e/v7x -> avoid ragged passes
        tile_m = _round_down(tile_m, 256)
    tile_m = max(SUBLANE, _round_down(tile_m, SUBLANE))
    return int(tile_m), int(tile_k)


def _plan_pass2(num_m_tiles_total, tile_m, cout_pad, budget):
    """Pass 2 is pure streaming: use the biggest tile (multiple of pass-1
    tile_m that divides Mp) that fits the budget."""
    per_row = 2 * (cout_pad * 2) + 2 * (cout_pad * 4)   # dbl bf16 in + dbl f32 out
    max_rows = max(tile_m, budget // per_row)
    g_best = 1
    for g in range(1, num_m_tiles_total + 1):
        if num_m_tiles_total % g == 0 and tile_m * g <= min(max_rows, 8192):
            g_best = g
    return tile_m * g_best


# ------------- Pass 1: conv matmul (K-split) + per-channel sum / sumsq -------------
def _conv_stats_kernel(patches_ref, w_ref, conv_ref, sum_ref, sumsq_ref, acc_ref):
    i = pl.program_id(1)                      # M-tile index within this core
    k = pl.program_id(2)                      # K-tile (reduction) index
    k_last = pl.num_programs(2) - 1

    @pl.when(jnp.logical_and(i == 0, k == 0))
    def _():                                  # per-core stats init (first visit)
        sum_ref[...] = jnp.zeros_like(sum_ref)
        sumsq_ref[...] = jnp.zeros_like(sumsq_ref)

    @pl.when(k == 0)
    def _():                                  # per-M-tile accumulator init
        acc_ref[...] = jnp.zeros_like(acc_ref)

    acc_ref[...] += jnp.dot(patches_ref[...], w_ref[...],
                            preferred_element_type=jnp.float32)   # bf16 x bf16 -> f32 MXU

    @pl.when(k == k_last)
    def _():
        conv = acc_ref[...]                                        # local f32 value
        conv_ref[...] = conv.astype(conv_ref.dtype)                # bf16 HBM write (half traffic)
        # Broadcast-add into the (SUBLANE, Coutp) stats block; all rows hold the
        # same totals, the host-side combine reads row 0 of each core's block.
        sum_ref[...] += jnp.sum(conv, axis=0, keepdims=True)
        sumsq_ref[...] += jnp.sum(conv * conv, axis=0, keepdims=True)


# ------------- Pass 2: apply batch-norm (elementwise streaming) -------------
def _bn_apply_kernel(conv_ref, scale_ref, shift_ref, out_ref):
    x = conv_ref[...].astype(jnp.float32)
    out_ref[...] = (x * scale_ref[...] + shift_ref[...]).astype(out_ref.dtype)


def dcgan_discriminator_block(x_nchw, weight_oihw, gamma, beta, *,
                              tile_m=None, tile_k=None,
                              output_format="NCHW", out_dtype=jnp.float32):
    """x: (N, Cin, H, W) f32; weight: (Cout, Cin, 4, 4); gamma/beta: (Cout,)."""
    N, Cin, H, W = x_nchw.shape
    Cout = weight_oihw.shape[0]
    Ho, Wo = H // 2, W // 2
    M = N * Ho * Wo
    K = Cin * 16
    Kp = _round_up(K, LANE)
    Coutp = _round_up(Cout, LANE)

    tile_budget, vmem_limit, n_cores = _hw_params()
    auto_m, auto_k = _plan_pass1(M, Kp, Coutp, tile_budget, n_cores)
    if tile_m is None:
        tile_m = auto_m
    tile_m = max(SUBLANE, _round_down(min(tile_m, _round_up(M, SUBLANE)), SUBLANE))
    if tile_k is None:
        tile_k = auto_k
    assert Kp % tile_k == 0 and tile_k % LANE == 0, "tile_k must divide Kp and be lane-dense"
    num_k = Kp // tile_k

    # ---- im2col built directly in NHWC, (kh, kw, c) tap order, bf16 ----
    # TODO(synk): fuse patch construction into pass 1 (manual DMA of shifted row
    # windows) so this 4x-size patch matrix never hits HBM.
    x_nhwc = jnp.transpose(x_nchw, (0, 2, 3, 1)).astype(jnp.bfloat16)
    xp = jnp.pad(x_nhwc, ((0, 0), (1, 1), (1, 1), (0, 0)))
    taps = [xp[:, kh:kh + 2 * Ho:2, kw:kw + 2 * Wo:2, :]
            for kh in range(4) for kw in range(4)]
    patches = jnp.concatenate(taps, axis=-1).reshape(M, K)

    # weights -> (Kp, Coutp) in matching (kh, kw, c) order, bf16, zero-padded
    w = jnp.transpose(weight_oihw, (0, 2, 3, 1)).reshape(Cout, K).T
    w = jnp.pad(w.astype(jnp.bfloat16), ((0, Kp - K), (0, Coutp - Cout)))

    num_m_tiles = pl.cdiv(M, tile_m)
    mpc = pl.cdiv(num_m_tiles, n_cores)      # M tiles per core
    num_m_total = mpc * n_cores
    Mp = num_m_total * tile_m
    # zero-pad M/K: padded rows give conv == 0, contributing nothing to sum/sumsq.
    patches = jnp.pad(patches, ((0, Mp - M), (0, Kp - K)))

    conv, csum, csumsq = pl.pallas_call(
        _conv_stats_kernel,
        out_shape=(jax.ShapeDtypeStruct((Mp, Coutp), jnp.bfloat16),        # bf16 intermediate
                   jax.ShapeDtypeStruct((n_cores * SUBLANE, Coutp), jnp.float32),
                   jax.ShapeDtypeStruct((n_cores * SUBLANE, Coutp), jnp.float32)),
        grid=(n_cores, mpc, num_k),
        in_specs=[
            pl.BlockSpec((tile_m, tile_k), lambda c, i, k: (c * mpc + i, k)),
            pl.BlockSpec((tile_k, Coutp), lambda c, i, k: (k, 0)),
        ],
        out_specs=(
            pl.BlockSpec((tile_m, Coutp), lambda c, i, k: (c * mpc + i, 0)),
            pl.BlockSpec((SUBLANE, Coutp), lambda c, i, k: (c, 0)),   # per-core stats block
            pl.BlockSpec((SUBLANE, Coutp), lambda c, i, k: (c, 0)),
        ),
        scratch_shapes=[pltpu.VMEM((tile_m, Coutp), jnp.float32)],   # f32 K-reduction accumulator
        compiler_params=pltpu.CompilerParams(
            dimension_semantics=("parallel", "arbitrary", "arbitrary"),
            vmem_limit_bytes=vmem_limit),
    )(patches, w)

    # ---- tiny per-channel combine (divide by the TRUE M, not Mp) ----
    csum = csum.reshape(n_cores, SUBLANE, Coutp)[:, 0, :].sum(axis=0, keepdims=True)
    csumsq = csumsq.reshape(n_cores, SUBLANE, Coutp)[:, 0, :].sum(axis=0, keepdims=True)
    mean = csum / M
    var = jnp.maximum(csumsq / M - mean * mean, 0.0)   # biased var (PyTorch training mode)
    # TODO(synk): switch to per-tile Chan-style (count, mean, M2) partials if channels
    # with |mean| >> std ever show cancellation in the one-pass formula.
    inv_std = lax.rsqrt(var + EPS)
    gamma_p = jnp.pad(gamma.astype(jnp.float32), (0, Coutp - Cout),
                      constant_values=1.0).reshape(1, Coutp)
    beta_p = jnp.pad(beta.astype(jnp.float32), (0, Coutp - Cout)).reshape(1, Coutp)
    scale = gamma_p * inv_std
    shift = beta_p - mean * scale

    # ---- Pass 2: streaming BN apply with its own (larger) tile ----
    tile_m2 = _plan_pass2(num_m_total, tile_m, Coutp, tile_budget)
    n_tiles2 = Mp // tile_m2
    out_flat = pl.pallas_call(
        _bn_apply_kernel,
        out_shape=jax.ShapeDtypeStruct((Mp, Coutp), out_dtype),
        grid=(n_tiles2,),
        in_specs=[
            pl.BlockSpec((tile_m2, Coutp), lambda i: (i, 0)),
            pl.BlockSpec((1, Coutp), lambda i: (0, 0)),
            pl.BlockSpec((1, Coutp), lambda i: (0, 0)),
        ],
        out_specs=pl.BlockSpec((tile_m2, Coutp), lambda i: (i, 0)),
        compiler_params=pltpu.CompilerParams(
            dimension_semantics=("parallel",),
            vmem_limit_bytes=vmem_limit),
    )(conv, scale, shift)
    # TODO(synk): add input_output_aliases={0: 0} (in-place BN on the conv buffer)
    # when out_dtype == bf16 and the wrapper runs under jit with donation.

    out_nhwc = out_flat[:M, :Cout].reshape(N, Ho, Wo, Cout)
    if output_format == "NHWC":
        return out_nhwc
    # NCHW transpose is layout plumbing outside Pallas; prefer NHWC in pipelines.
    return jnp.transpose(out_nhwc, (0, 3, 1, 2))


def reference(x, w, gamma, beta):
    conv = lax.conv_general_dilated(
        x, w, window_strides=(2, 2), padding=((1, 1), (1, 1)),
        dimension_numbers=("NCHW", "OIHW", "NCHW"))
    mean = conv.mean(axis=(0, 2, 3), keepdims=True)
    var = ((conv - mean) ** 2).mean(axis=(0, 2, 3), keepdims=True)
    g = gamma.reshape(1, -1, 1, 1)
    b = beta.reshape(1, -1, 1, 1)
    return (conv - mean) * lax.rsqrt(var + EPS) * g + b


if __name__ == "__main__":
    key = jax.random.PRNGKey(0)
    k1, k2, k3, k4, k5, k6 = jax.random.split(key, 6)

    # ---------- Test 1: toy DCGAN block, multi-M-tile grid ----------
    N, Cin, Cout, H, W = 2, 4, 8, 16, 16
    x = jax.random.normal(k1, (N, Cin, H, W), dtype=jnp.float32)
    weight = 0.02 * jax.random.normal(k2, (Cout, Cin, 4, 4), dtype=jnp.float32)
    gamma = 1.0 + 0.1 * jax.random.normal(k3, (Cout,), dtype=jnp.float32)
    beta = 0.1 * jax.random.normal(k4, (Cout,), dtype=jnp.float32)

    # tile_m=64 -> M=128 splits into 2 tiles, exercising cross-tile (or cross-core)
    # stats accumulation even at this toy size.
    out = dcgan_discriminator_block(x, weight, gamma, beta, tile_m=64)
    out = jax.block_until_ready(out)
    assert out.shape == (N, Cout, H // 2, W // 2)

    # Tight check vs a bf16-input reference (kernel uses bf16 MXU inputs + bf16
    # conv intermediate, f32 accumulation/statistics).
    ref_bf16 = jax.block_until_ready(reference(
        x.astype(jnp.bfloat16).astype(jnp.float32),
        weight.astype(jnp.bfloat16).astype(jnp.float32), gamma, beta))
    assert jnp.allclose(out, ref_bf16, atol=3e-2, rtol=3e-2), "mismatch vs bf16 reference"

    # Loose check vs the full-f32 PyTorch-semantics reference (bf16 compute is a
    # deliberate precision choice).
    ref_f32 = jax.block_until_ready(reference(x, weight, gamma, beta))
    assert jnp.allclose(out, ref_f32, atol=7e-2, rtol=7e-2), "mismatch vs f32 reference"

    # ---------- Test 2: exercises the K-split reduction axis + NHWC output ----------
    N2, Cin2, Cout2, H2, W2 = 2, 16, 16, 8, 8          # K = 256 -> 2 K-tiles of 128
    x2 = jax.random.normal(k5, (N2, Cin2, H2, W2), dtype=jnp.float32)
    w2 = 0.02 * jax.random.normal(k6, (Cout2, Cin2, 4, 4), dtype=jnp.float32)
    g2 = jnp.ones((Cout2,), jnp.float32)
    b2 = jnp.zeros((Cout2,), jnp.float32)

    out2 = dcgan_discriminator_block(x2, w2, g2, b2, tile_m=16, tile_k=128,
                                     output_format="NHWC")
    out2 = jax.block_until_ready(out2)
    assert out2.shape == (N2, H2 // 2, W2 // 2, Cout2)
    ref2 = jax.block_until_ready(reference(
        x2.astype(jnp.bfloat16).astype(jnp.float32),
        w2.astype(jnp.bfloat16).astype(jnp.float32), g2, b2))
    ref2_nhwc = jnp.transpose(ref2, (0, 2, 3, 1))
    assert jnp.allclose(out2, ref2_nhwc, atol=3e-2, rtol=3e-2), "K-split mismatch"

    print("KERNEL_OK")
</pallas_src>

<mosaic_0001>
module attributes {stable_mosaic.version = 11 : i64} {
  func.func @_conv_stats_kernel(%arg0: i32, %arg1: i32, %arg2: i32, %arg3: memref<64x128xbf16, #tpu.memory_space<vmem>>, %arg4: memref<128x128xbf16, #tpu.memory_space<vmem>>, %arg5: memref<64x128xbf16, #tpu.memory_space<vmem>>, %arg6: memref<8x128xf32, #tpu.memory_space<vmem>>, %arg7: memref<8x128xf32, #tpu.memory_space<vmem>>, %arg8: memref<64x128xf32, #tpu.memory_space<vmem>>) attributes {dimension_semantics = [#tpu.dimension_semantics<parallel>, #tpu.dimension_semantics<arbitrary>, #tpu.dimension_semantics<arbitrary>], iteration_bounds = array<i64: 1, 2, 1>, scalar_prefetch = 0 : i64, scratch_operands = 1 : i64, tpu.core_type = #tpu.core_type<tc>, window_params = [{transform_indices = @transform_0, window_bounds = array<i64: 64, 128>}, {transform_indices = @transform_1, window_bounds = array<i64: 128, 128>}, {transform_indices = @transform_2, window_bounds = array<i64: 64, 128>}, {transform_indices = @transform_3, window_bounds = array<i64: 8, 128>}, {transform_indices = @transform_4, window_bounds = array<i64: 8, 128>}]} {
    %c0_i32 = arith.constant 0 : i32
    %0 = arith.cmpi eq, %arg1, %c0_i32 : i32
    %c0_i32_0 = arith.constant 0 : i32
    %1 = arith.cmpi eq, %arg2, %c0_i32_0 : i32
    %2 = arith.andi %0, %1 : i1
    %3 = arith.extui %2 : i1 to i32
    %c0_i32_1 = arith.constant 0 : i32
    %4 = arith.cmpi ne, %3, %c0_i32_1 : i32
    scf.if %4 {
      %cst_13 = arith.constant 0.000000e+00 : f32
      %17 = vector.broadcast %cst_13 : f32 to vector<8x128xf32>
      %c0_14 = arith.constant 0 : index
      %c0_15 = arith.constant 0 : index
      %18 = vector.load %arg6[%c0_14, %c0_15] : memref<8x128xf32, #tpu.memory_space<vmem>>, vector<8x128xf32>
      tpu.vector_store %arg6[%c0_14, %c0_15], %17 {strides = array<i32>} : memref<8x128xf32, #tpu.memory_space<vmem>>, vector<8x128xf32>,
      %cst_16 = arith.constant 0.000000e+00 : f32
      %19 = vector.broadcast %cst_16 : f32 to vector<8x128xf32>
      %c0_17 = arith.constant 0 : index
      %c0_18 = arith.constant 0 : index
      %20 = vector.load %arg7[%c0_17, %c0_18] : memref<8x128xf32, #tpu.memory_space<vmem>>, vector<8x128xf32>
      tpu.vector_store %arg7[%c0_17, %c0_18], %19 {strides = array<i32>} : memref<8x128xf32, #tpu.memory_space<vmem>>, vector<8x128xf32>,
    } else {
    }
    %c0_i32_2 = arith.constant 0 : i32
    %5 = arith.cmpi eq, %arg2, %c0_i32_2 : i32
    %6 = arith.extui %5 : i1 to i32
    %c0_i32_3 = arith.constant 0 : i32
    %7 = arith.cmpi ne, %6, %c0_i32_3 : i32
    scf.if %7 {
      %cst_13 = arith.constant 0.000000e+00 : f32
      %17 = vector.broadcast %cst_13 : f32 to vector<64x128xf32>
      %c0_14 = arith.constant 0 : index
      %c0_15 = arith.constant 0 : index
      %18 = vector.load %arg8[%c0_14, %c0_15] : memref<64x128xf32, #tpu.memory_space<vmem>>, vector<64x128xf32>
      tpu.vector_store %arg8[%c0_14, %c0_15], %17 {strides = array<i32>} : memref<64x128xf32, #tpu.memory_space<vmem>>, vector<64x128xf32>,
    } else {
    }
    %c0 = arith.constant 0 : index
    %c0_4 = arith.constant 0 : index
    %8 = vector.load %arg8[%c0, %c0_4] : memref<64x128xf32, #tpu.memory_space<vmem>>, vector<64x128xf32>
    %c0_5 = arith.constant 0 : index
    %c0_6 = arith.constant 0 : index
    %9 = vector.load %arg3[%c0_5, %c0_6] : memref<64x128xbf16, #tpu.memory_space<vmem>>, vector<64x128xbf16>
    %c0_7 = arith.constant 0 : index
    %c0_8 = arith.constant 0 : index
    %10 = vector.load %arg4[%c0_7, %c0_8] : memref<128x128xbf16, #tpu.memory_space<vmem>>, vector<128x128xbf16>
    %cst = arith.constant dense<0.000000e+00> : vector<64x128xf32>
    %11 = tpu.matmul %9, %10, %cst {dimension_numbers = #tpu.dot_dimension_numbers<[1], [0], [0], [1], [0, 0, 1, 1], [], []>} : vector<64x128xbf16>, vector<128x128xbf16>, vector<64x128xf32> -> vector<64x128xf32>
    %12 = arith.addf %8, %11 : vector<64x128xf32>
    %c0_9 = arith.constant 0 : index
    %c0_10 = arith.constant 0 : index
    %13 = vector.load %arg8[%c0_9, %c0_10] : memref<64x128xf32, #tpu.memory_space<vmem>>, vector<64x128xf32>
    tpu.vector_store %arg8[%c0_9, %c0_10], %12 {strides = array<i32>} : memref<64x128xf32, #tpu.memory_space<vmem>>, vector<64x128xf32>,
    %c0_i32_11 = arith.constant 0 : i32
    %14 = arith.cmpi eq, %arg2, %c0_i32_11 : i32
    %15 = arith.extui %14 : i1 to i32
    %c0_i32_12 = arith.constant 0 : i32
    %16 = arith.cmpi ne, %15, %c0_i32_12 : i32
    scf.if %16 {
      %c0_13 = arith.constant 0 : index
      %c0_14 = arith.constant 0 : index
      %17 = vector.load %arg8[%c0_13, %c0_14] : memref<64x128xf32, #tpu.memory_space<vmem>>, vector<64x128xf32>
      %18 = arith.truncf %17 : vector<64x128xf32> to vector<64x128xbf16>
      %c0_15 = arith.constant 0 : index
      %c0_16 = arith.constant 0 : index
      %19 = vector.load %arg5[%c0_15, %c0_16] : memref<64x128xbf16, #tpu.memory_space<vmem>>, vector<64x128xbf16>
      tpu.vector_store %arg5[%c0_15, %c0_16], %18 {strides = array<i32>} : memref<64x128xbf16, #tpu.memory_space<vmem>>, vector<64x128xbf16>,
      %c0_17 = arith.constant 0 : index
      %c0_18 = arith.constant 0 : index
      %20 = vector.load %arg6[%c0_17, %c0_18] : memref<8x128xf32, #tpu.memory_space<vmem>>, vector<8x128xf32>
      %cst_19 = arith.constant dense<0.000000e+00> : vector<128xf32>
      %21 = vector.multi_reduction <add>, %17, %cst_19 [0] : vector<64x128xf32> to vector<128xf32>
      %22 = vector.shape_cast %21 : vector<128xf32> to vector<1x128xf32>
      %23 = vector.broadcast %22 : vector<1x128xf32> to vector<8x128xf32>
      %24 = arith.addf %20, %23 : vector<8x128xf32>
      %c0_20 = arith.constant 0 : index
      %c0_21 = arith.constant 0 : index
      %25 = vector.load %arg6[%c0_20, %c0_21] : memref<8x128xf32, #tpu.memory_space<vmem>>, vector<8x128xf32>
      tpu.vector_store %arg6[%c0_20, %c0_21], %24 {strides = array<i32>} : memref<8x128xf32, #tpu.memory_space<vmem>>, vector<8x128xf32>,
      %c0_22 = arith.constant 0 : index
      %c0_23 = arith.constant 0 : index
      %26 = vector.load %arg7[%c0_22, %c0_23] : memref<8x128xf32, #tpu.memory_space<vmem>>, vector<8x128xf32>
      %27 = arith.mulf %17, %17 : vector<64x128xf32>
      %cst_24 = arith.constant dense<0.000000e+00> : vector<128xf32>
      %28 = vector.multi_reduction <add>, %27, %cst_24 [0] : vector<64x128xf32> to vector<128xf32>
      %29 = vector.shape_cast %28 : vector<128xf32> to vector<1x128xf32>
      %30 = vector.broadcast %29 : vector<1x128xf32> to vector<8x128xf32>
      %31 = arith.addf %26, %30 : vector<8x128xf32>
      %c0_25 = arith.constant 0 : index
      %c0_26 = arith.constant 0 : index
      %32 = vector.load %arg7[%c0_25, %c0_26] : memref<8x128xf32, #tpu.memory_space<vmem>>, vector<8x128xf32>
      tpu.vector_store %arg7[%c0_25, %c0_26], %31 {strides = array<i32>} : memref<8x128xf32, #tpu.memory_space<vmem>>, vector<8x128xf32>,
    } else {
    }
    return
  }
  func.func @transform_0(%arg0: i32, %arg1: i32, %arg2: i32) -> (i32, i32) {
    %c2_i32 = arith.constant 2 : i32
    %0 = arith.muli %arg0, %c2_i32 : i32
    %1 = arith.addi %0, %arg1 : i32
    %c0_i32 = arith.constant 0 : i32
    return %1, %arg2 : i32, i32
  }
  func.func @transform_1(%arg0: i32, %arg1: i32, %arg2: i32) -> (i32, i32) {
    %c0_i32 = arith.constant 0 : i32
    %c0_i32_0 = arith.constant 0 : i32
    return %arg2, %c0_i32 : i32, i32
  }
  func.func @transform_2(%arg0: i32, %arg1: i32, %arg2: i32) -> (i32, i32) {
    %c2_i32 = arith.constant 2 : i32
    %0 = arith.muli %arg0, %c2_i32 : i32
    %1 = arith.addi %0, %arg1 : i32
    %c0_i32 = arith.constant 0 : i32
    %c0_i32_0 = arith.constant 0 : i32
    return %1, %c0_i32 : i32, i32
  }
  func.func @transform_3(%arg0: i32, %arg1: i32, %arg2: i32) -> (i32, i32) {
    %c0_i32 = arith.constant 0 : i32
    %c0_i32_0 = arith.constant 0 : i32
    return %arg0, %c0_i32 : i32, i32
  }
  func.func @transform_4(%arg0: i32, %arg1: i32, %arg2: i32) -> (i32, i32) {
    %c0_i32 = arith.constant 0 : i32
    %c0_i32_0 = arith.constant 0 : i32
    return %arg0, %c0_i32 : i32, i32
  }
}

</mosaic_0001>

<llo_original>
// kernel: tpu_custom_call.1
$region0: #{tpu_custom_call.1}
  #allocation0 [shape = 'u32[]', space=smem, size = 0x4, offset = 0x4, fixed_abs, tag = 'smem constant byte address 0x4 - core index']
  #allocation1 [shape = 'u32[72,128]{1,0:T(1,128)}', space=vmem, size = 0x9000, scoped, tag = 'internal scratch']
  #allocation2 [shape = 'f32[64,128]{1,0:T(8,128)}', space=vmem, size = 0x8000, scoped, tag = 'scratch operand']
  %s0 = inlined_call_operand.hbm [shape: bf16[128,128], index: 0, kind: input, shape index: {}]
  %s1 = inlined_call_operand.hbm [shape: bf16[128,128], index: 1, kind: input, shape index: {}]
  %s2 = inlined_call_operand.hbm [shape: bf16[128,128], index: 2, kind: output, shape index: {0}]
  %s3 = inlined_call_operand.hbm [shape: f32[8,128], index: 3, kind: output, shape index: {1}]
  %s4 = inlined_call_operand.hbm [shape: f32[8,128], index: 4, kind: output, shape index: {2}]
  %5 = xla_tuple %s2, %s3, %s4
  %s6 = sld [smem:[#allocation0]]
  $region77: #{tpu_custom_call.1} parent=0
    _
  %s8 = ssub.s32 1, %s6
  %s9 = scalar_select 0, %s8, %s6
  $region1: #{tpu_custom_call.1} parent=0
    #allocation3 [shape = 'u8[32768]{0}', space=vmem, size = 0x8000, scoped, tag = 'input window, operand 0']
    #allocation4 [shape = 's32[2]{0}', space=sflag, size = 0x8, scoped, tag = 'scoped memory for tpu_custom_call.1']
    #allocation5 [shape = 's32[2]{0}', space=sflag, size = 0x8, scoped, tag = 'scoped memory for tpu_custom_call.1']
    #allocation6 [shape = 'u8[32768]{0}', space=vmem, size = 0x8000, scoped, tag = 'input window, operand 1, single buffered']
    #allocation7 [shape = 's32[1]{0}', space=sflag, size = 0x4, scoped, tag = 'scoped memory for tpu_custom_call.1']
    #allocation8 [shape = 'u8[32768]{0}', space=vmem, size = 0x8000, scoped, tag = 'output window, operand 0']
    #allocation9 [shape = 'u8[4096]{0}', space=vmem, size = 0x1000, scoped, tag = 'output window, operand 1, single buffered']
    #allocation10 [shape = 's32[1]{0}', space=sflag, size = 0x4, scoped, tag = 'scoped memory for tpu_custom_call.1']
    #allocation11 [shape = 'u8[4096]{0}', space=vmem, size = 0x1000, scoped, tag = 'output window, operand 2, single buffered']
    %10 = vsyncpa [#allocation4], 0
    %s11 = scalar_lea.sflag [#allocation4], 1
    %12 = vsyncpa %s11, 0
    %13 = vsyncpa [#allocation7], 0
    %14 = vsyncpa [#allocation5], 0
    %s15 = scalar_lea.sflag [#allocation5], 1
    %16 = vsyncpa %s15, 0
    %17 = vsyncpa [#allocation10], 0
    loop: start=0, step=1, limit=4
    $region2: #{tpu_custom_call.1} parent=1 // loop_pre_header
      _
    $region3: #{tpu_custom_call.1} parent=1 // loop_header
      %s19 = sphi 0, %s23
      %p20 = scmp.ge.s32.totalorder %s19, 4
      %s26 = sphi 0, %s45
      %s27 = sphi 0, %s41
      %s28 = sphi 0, %s37
      %s29 = sphi 0, %s26
      %s30 = sphi 0, %s27
      %s31 = sphi 0, %s28
      %s32 = sphi 0, %s29
      %s33 = sphi 0, %s30
      %s34 = sphi 0, %s31
      %s54 = sphi 0, %s56
      %s57 = sphi 0, %s54
      %s58 = sphi 0, %s57
      %s74 = sphi 0, %s58
      %s80 = sphi 0, %s82
      %s83 = sphi 0, %s80
      %s84 = sphi 0, %s83
      %s100 = sphi 0, %s84
      %s110 = sphi 0, %s112
      %s113 = sphi 0, %s110
      %s114 = sphi 0, %s113
      %s130 = sphi 0, %s114
      %s136 = sphi 0, %s138
      %s139 = sphi 0, %s136
      %s140 = sphi 0, %s139
      %s156 = sphi 0, %s140
      %s162 = sphi 0, %s164
      %s165 = sphi 0, %s162
      %s166 = sphi 0, %s165
      %s182 = sphi 0, %s166
    $region4: #{tpu_custom_call.1} parent=1 // loop_header_branch
      %22 = sbr.rel (%p20) target = $region8
    $region5: #{tpu_custom_call.1} parent=1 // loop_body
      %s24 = ssub.s32 %s19, 1
      %s25 = ssub.s32 %s19, 2
      %s35 = sadd.s32 1, %s28
      %p36 = scmp.ge.s32.totalorder %s35, 1
      %s37 = scalar_select %p36, 0, %s35
      %s38 = sadd.s32 1, %s27
      %s39 = scalar_select %p36, %s38, %s27
      %p40 = scmp.ge.s32.totalorder %s39, 2
      %s41 = scalar_select %p40, 0, %s39
      %s42 = sadd.s32 1, %s26
      %s43 = scalar_select %p40, %s42, %s26
      %p44 = scmp.ge.s32.totalorder %s43, 1
      %s45 = scalar_select %p44, 0, %s43
      %s46 = smul.u32 %s26, 2
      %s47 = sadd.s32 %s46, %s27
      %s48 = smul.u32 %s45, 2
      %s49 = sadd.s32 %s48, %s41
      %s50 = ssub.s32 %s47, %s49
      %s51 = ssub.s32 %s28, %s37
      %s52 = sor.u32 %s50, %s51
      %p53 = scmp.eq.s32.totalorder %s52, 0
      %s55 = sadd.s32 %s54, 1
      %s56 = scalar_select %p53, %s54, %s55
      %p59 = pneg %p53
      %p60 = scmp.eq.s32.totalorder %s19, 1
      %p61 = por %p59, %p60
      %p62 = scmp.ne.s32.totalorder %s54, %s57
      %p63 = scmp.eq.s32.totalorder %s19, 0
      %p64 = por %p62, %p63
      %p65 = scmp.ne.s32.totalorder %s54, %s57
      %p66 = scmp.eq.s32.totalorder %s24, 1
      %p67 = por %p65, %p66
      %p68 = scmp.ne.s32.totalorder %s57, %s58
      %p69 = scmp.eq.s32.totalorder %s24, 0
      %p70 = por %p68, %p69
      %p71 = scmp.ne.s32.totalorder %s57, %s58
      %p72 = scmp.eq.s32.totalorder %s25, 1
      %p73 = por %p71, %p72
      %p75 = scmp.ne.s32.totalorder %s58, %s74
      %p76 = scmp.eq.s32.totalorder %s25, 0
      %p77 = por %p75, %p76
      %s78 = ssub.s32 %s28, %s37
      %p79 = scmp.eq.s32.totalorder %s78, 0
      %s81 = sadd.s32 %s80, 1
      %s82 = scalar_select %p79, %s80, %s81
      %p85 = pneg %p79
      %p86 = scmp.eq.s32.totalorder %s19, 1
      %p87 = por %p85, %p86
      %p88 = scmp.ne.s32.totalorder %s80, %s83
      %p89 = scmp.eq.s32.totalorder %s19, 0
      %p90 = por %p88, %p89
      %p91 = scmp.ne.s32.totalorder %s80, %s83
      %p92 = scmp.eq.s32.totalorder %s24, 1
      %p93 = por %p91, %p92
      %p94 = scmp.ne.s32.totalorder %s83, %s84
      %p95 = scmp.eq.s32.totalorder %s24, 0
      %p96 = por %p94, %p95
      %p97 = scmp.ne.s32.totalorder %s83, %s84
      %p98 = scmp.eq.s32.totalorder %s25, 1
      %p99 = por %p97, %p98
      %p101 = scmp.ne.s32.totalorder %s84, %s100
      %p102 = scmp.eq.s32.totalorder %s25, 0
      %p103 = por %p101, %p102
      %s104 = smul.u32 %s26, 2
      %s105 = sadd.s32 %s104, %s27
      %s106 = smul.u32 %s45, 2
      %s107 = sadd.s32 %s106, %s41
      %s108 = ssub.s32 %s105, %s107
      %p109 = scmp.eq.s32.totalorder %s108, 0
      %s111 = sadd.s32 %s110, 1
      %s112 = scalar_select %p109, %s110, %s111
      %p115 = pneg %p109
      %p116 = scmp.eq.s32.totalorder %s19, 1
      %p117 = por %p115, %p116
      %p118 = scmp.ne.s32.totalorder %s110, %s113
      %p119 = scmp.eq.s32.totalorder %s19, 0
      %p120 = por %p118, %p119
      %p121 = scmp.ne.s32.totalorder %s110, %s113
      %p122 = scmp.eq.s32.totalorder %s24, 1
      %p123 = por %p121, %p122
      %p124 = scmp.ne.s32.totalorder %s113, %s114
      %p125 = scmp.eq.s32.totalorder %s24, 0
      %p126 = por %p124, %p125
      %p127 = scmp.ne.s32.totalorder %s113, %s114
      %p128 = scmp.eq.s32.totalorder %s25, 1
      %p129 = por %p127, %p128
      %p131 = scmp.ne.s32.totalorder %s114, %s130
      %p132 = scmp.eq.s32.totalorder %s25, 0
      %p133 = por %p131, %p132
      %s134 = ssub.s32 %s26, %s45
      %p135 = scmp.eq.s32.totalorder %s134, 0
      %s137 = sadd.s32 %s136, 1
      %s138 = scalar_select %p135, %s136, %s137
      %p141 = pneg %p135
      %p142 = scmp.eq.s32.totalorder %s19, 1
      %p143 = por %p141, %p142
      %p144 = scmp.ne.s32.totalorder %s136, %s139
      %p145 = scmp.eq.s32.totalorder %s19, 0
      %p146 = por %p144, %p145
      %p147 = scmp.ne.s32.totalorder %s136, %s139
      %p148 = scmp.eq.s32.totalorder %s24, 1
      %p149 = por %p147, %p148
      %p150 = scmp.ne.s32.totalorder %s139, %s140
      %p151 = scmp.eq.s32.totalorder %s24, 0
      %p152 = por %p150, %p151
      %p153 = scmp.ne.s32.totalorder %s139, %s140
      %p154 = scmp.eq.s32.totalorder %s25, 1
      %p155 = por %p153, %p154
      %p157 = scmp.ne.s32.totalorder %s140, %s156
      %p158 = scmp.eq.s32.totalorder %s25, 0
      %p159 = por %p157, %p158
      %s160 = ssub.s32 %s26, %s45
      %p161 = scmp.eq.s32.totalorder %s160, 0
      %s163 = sadd.s32 %s162, 1
      %s164 = scalar_select %p161, %s162, %s163
      %p167 = pneg %p161
      %p168 = scmp.eq.s32.totalorder %s19, 1
      %p169 = por %p167, %p168
      %p170 = scmp.ne.s32.totalorder %s162, %s165
      %p171 = scmp.eq.s32.totalorder %s19, 0
      %p172 = por %p170, %p171
      %p173 = scmp.ne.s32.totalorder %s162, %s165
      %p174 = scmp.eq.s32.totalorder %s24, 1
      %p175 = por %p173, %p174
      %p176 = scmp.ne.s32.totalorder %s165, %s166
      %p177 = scmp.eq.s32.totalorder %s24, 0
      %p178 = por %p176, %p177
      %p179 = scmp.ne.s32.totalorder %s165, %s166
      %p180 = scmp.eq.s32.totalorder %s25, 1
      %p181 = por %p179, %p180
      %p183 = scmp.ne.s32.totalorder %s166, %s182
      %p184 = scmp.eq.s32.totalorder %s25, 0
      %p185 = por %p183, %p184
      %p186 = scmp.le.s32.totalorder 1, %s19
      %p187 = scmp.lt.s32.totalorder %s19, 3
      %p188 = pnand %p186, %p187
      %p189 = pneg %p188
      // Predicated region
      $region9: #{tpu_custom_call.1} parent=5 // pred_check
        _
      $region10: #{tpu_custom_call.1} parent=5 // pred_check_branch
        %191 = sbr.rel (%p188) target = $region12
      $region11: #{tpu_custom_call.1} parent=5 // pred_region
        %s192 = ssub.s32 %s19, 1
        // Predicated region
        $region13: #{tpu_custom_call.1} parent=11 // pred_check
          %p193 = pneg %p96
        $region14: #{tpu_custom_call.1} parent=11 // pred_check_branch
          %195 = sbr.rel (%p193) target = $region16
        $region15: #{tpu_custom_call.1} parent=11 // pred_region
          %s196 = smul.u32 16, %s31
          %198 = vsyncadd [#allocation7], 0
          %s199 = smul.addr %s196, 4
          %s200 = scalar_lea.hbm %s1, %s199
          %s201 = sshll.u32 %s200, 4
          %s202 = int_to_ptr.hbm [resolvable:$true] %s201
          %s203 = sshll.u32 [#allocation6], 4
          %s204 = int_to_ptr.vmem [resolvable:$true] %s203
          %209 = dma.hbm_to_vmem [thread:$0]  %s202, 1024, %s204, [#allocation7], 64, 64, 4
        $region16: #{tpu_custom_call.1} parent=11 // pred_fallthru
          _
      $region12: #{tpu_custom_call.1} parent=5 // pred_fallthru
        _
      %p210 = scmp.lt.s32.totalorder %s19, 2
      // Predicated region
      $region17: #{tpu_custom_call.1} parent=5 // pred_check
        %p211 = pneg %p210
      $region18: #{tpu_custom_call.1} parent=5 // pred_check_branch
        %213 = sbr.rel (%p211) target = $region20
      $region19: #{tpu_custom_call.1} parent=5 // pred_region
        // Predicated region
        $region21: #{tpu_custom_call.1} parent=19 // pred_check
          %p214 = pneg %p64
        $region22: #{tpu_custom_call.1} parent=19 // pred_check_branch
          %216 = sbr.rel (%p214) target = $region24
        $region23: #{tpu_custom_call.1} parent=19 // pred_region
          %s217 = sand.u32 %s54, 1
          %s218 = scalar_lea.sflag [#allocation4], %s217
          %s219 = sand.u32 %s54, 1
          %s220 = smul.addr %s219, 32
          %s221 = scalar_lea.vmem [#allocation3], %s220
          %s222 = smul.u32 %s26, 2
          %s223 = sadd.s32 %s222, %s27
          %s224 = smul.u32 8, %s223
          %226 = vsyncadd %s218, 0
          %s227 = sadd.s32 %s28, %s224
          %s228 = smul.addr %s227, 4
          %s229 = scalar_lea.hbm %s0, %s228
          %s230 = sshll.u32 %s229, 4
          %s231 = int_to_ptr.hbm [resolvable:$true] %s230
          %s232 = sshll.u32 %s221, 4
          %s233 = int_to_ptr.vmem [resolvable:$true] %s232
          %238 = dma.hbm_to_vmem [thread:$0]  %s231, 512, %s233, %s218, 64, 64, 4
        $region24: #{tpu_custom_call.1} parent=19 // pred_fallthru
          _
      $region20: #{tpu_custom_call.1} parent=5 // pred_fallthru
        _
      %p239 = scmp.le.s32.totalorder 1, %s19
      %p240 = scmp.lt.s32.totalorder %s19, 3
      %p241 = pnand %p239, %p240
      %p242 = pneg %p241
      // Predicated region
      $region25: #{tpu_custom_call.1} parent=5 // pred_check
        _
      $region26: #{tpu_custom_call.1} parent=5 // pred_check_branch
        %244 = sbr.rel (%p241) target = $region28
      $region27: #{tpu_custom_call.1} parent=5 // pred_region
        %s245 = ssub.s32 %s19, 1
        %s246 = sand.u32 %s57, 1
        %s247 = scalar_lea.sflag [#allocation4], %s246
        %s248 = sand.u32 %s57, 1
        %s249 = smul.addr %s248, 32
        %s250 = scalar_lea.vmem [#allocation3], %s249
        // Predicated region
        $region29: #{tpu_custom_call.1} parent=27 // pred_check
          %p251 = pneg %p70
        $region30: #{tpu_custom_call.1} parent=27 // pred_check_branch
          %253 = sbr.rel (%p251) target = $region32
        $region31: #{tpu_custom_call.1} parent=27 // pred_region
          %255 = dma.done %s247, 512
        $region32: #{tpu_custom_call.1} parent=27 // pred_fallthru
          _
        // Predicated region
        $region33: #{tpu_custom_call.1} parent=27 // pred_check
          %p256 = pneg %p96
        $region34: #{tpu_custom_call.1} parent=27 // pred_check_branch
          %258 = sbr.rel (%p256) target = $region36
        $region35: #{tpu_custom_call.1} parent=27 // pred_region
          %260 = dma.done [#allocation7], 1024
        $region36: #{tpu_custom_call.1} parent=27 // pred_fallthru
          _
        %s261 = sand.u32 %s57, 1
        %s262 = scalar_lea.sflag [#allocation4], %s261
        %s263 = sand.u32 %s57, 1
        %s264 = smul.addr %s263, 32
        %s265 = scalar_lea.vmem [#allocation3], %s264
        %p266 = pneg %p70
        %p267 = pneg %p67
        %p268 = pneg %p96
        %p269 = pneg %p93
        %p270 = pneg %p126
        %p271 = pneg %p123
        %s272 = sand.u32 %s113, 1
        %s273 = scalar_lea.sflag [#allocation5], %s272
        %s274 = sand.u32 %s113, 1
        %s275 = smul.addr %s274, 32
        %s276 = scalar_lea.vmem [#allocation8], %s275
        %p277 = pneg %p152
        %p278 = pneg %p149
        %p279 = pneg %p178
        %p280 = pneg %p175
        %s281 = smul.u32 %s29, 2
        %s282 = sadd.s32 %s281, %s30
        %s283 = smul.u32 8, %s282
        %s284 = smul.u32 16, %s31
        %s285 = smul.u32 %s29, 2
        %s286 = sadd.s32 %s285, %s30
        %s287 = smul.u32 8, %s286
        %p288 = scmp.eq.s32.totalorder %s30, 0
        %p289 = scmp.eq.s32.totalorder %s31, 0
        %p290 = pnand %p288, %p289
        %p291 = pneg %p290
        // Predicated region
        $region37: #{tpu_custom_call.1} parent=27 // pred_check
          _
        $region38: #{tpu_custom_call.1} parent=27 // pred_check_branch
          %293 = sbr.rel (%p290) target = $region40
        $region39: #{tpu_custom_call.1} parent=27 // pred_region
          %294 = vst [vmem:[#allocation9] sm:$0xff] 0.0
          %295 = vst [vmem:[#allocation11] sm:$0xff] 0.0
        $region40: #{tpu_custom_call.1} parent=27 // pred_fallthru
          _
        // Predicated region
        $region41: #{tpu_custom_call.1} parent=27 // pred_check
          %p296 = pneg %p289
        $region42: #{tpu_custom_call.1} parent=27 // pred_check_branch
          %298 = sbr.rel (%p296) target = $region44
        $region43: #{tpu_custom_call.1} parent=27 // pred_region
          %299 = vst [vmem:[#allocation2] sm:$0xff] 0.0
          %300 = vst [vmem:[#allocation2 + $0x8] sm:$0xff] 0.0
          %301 = vst [vmem:[#allocation2 + $0x10] sm:$0xff] 0.0
          %302 = vst [vmem:[#allocation2 + $0x18] sm:$0xff] 0.0
          %303 = vst [vmem:[#allocation2 + $0x20] sm:$0xff] 0.0
          %304 = vst [vmem:[#allocation2 + $0x28] sm:$0xff] 0.0
          %305 = vst [vmem:[#allocation2 + $0x30] sm:$0xff] 0.0
          %306 = vst [vmem:[#allocation2 + $0x38] sm:$0xff] 0.0
        $region44: #{tpu_custom_call.1} parent=27 // pred_fallthru
          _
        %v307 = vld [vmem:[#allocation2] sm:$0xff]
        %v308 = vld [vmem:[#allocation2 + $0x8] sm:$0xff]
        %v309 = vld [vmem:[#allocation2 + $0x10] sm:$0xff]
        %v310 = vld [vmem:[#allocation2 + $0x18] sm:$0xff]
        %v311 = vld [vmem:[#allocation2 + $0x20] sm:$0xff]
        %v312 = vld [vmem:[#allocation2 + $0x28] sm:$0xff]
        %v313 = vld [vmem:[#allocation2 + $0x30] sm:$0xff]
        %v314 = vld [vmem:[#allocation2 + $0x38] sm:$0xff]
        %v315 = vld [vmem:[%s250] sm:$0xf]
        %v316 = vld [vmem:[%s250 + $0x4] sm:$0xf]
        %v317 = vld [vmem:[%s250 + $0x8] sm:$0xf]
        %v318 = vld [vmem:[%s250 + $0xc] sm:$0xf]
        %v319 = vld [vmem:[%s250 + $0x10] sm:$0xf]
        %v320 = vld [vmem:[%s250 + $0x14] sm:$0xf]
        %v321 = vld [vmem:[%s250 + $0x18] sm:$0xf]
        %v322 = vld [vmem:[%s250 + $0x1c] sm:$0xf]
        %v323 = vld [vmem:[#allocation6] sm:$0xf]
        %v324 = vld [vmem:[#allocation6 + $0x4] sm:$0xf]
        %v325 = vld [vmem:[#allocation6 + $0x8] sm:$0xf]
        %v326 = vld [vmem:[#allocation6 + $0xc] sm:$0xf]
        %v327 = vld [vmem:[#allocation6 + $0x10] sm:$0xf]
        %v328 = vld [vmem:[#allocation6 + $0x14] sm:$0xf]
        %v329 = vld [vmem:[#allocation6 + $0x18] sm:$0xf]
        %v330 = vld [vmem:[#allocation6 + $0x1c] sm:$0xf]
        %v331 = vld [vmem:[#allocation6 + $0x20] sm:$0xf]
        %v332 = vld [vmem:[#allocation6 + $0x24] sm:$0xf]
        %v333 = vld [vmem:[#allocation6 + $0x28] sm:$0xf]
        %v334 = vld [vmem:[#allocation6 + $0x2c] sm:$0xf]
        %v335 = vld [vmem:[#allocation6 + $0x30] sm:$0xf]
        %v336 = vld [vmem:[#allocation6 + $0x34] sm:$0xf]
        %v337 = vld [vmem:[#allocation6 + $0x38] sm:$0xf]
        %v338 = vld [vmem:[#allocation6 + $0x3c] sm:$0xf]
        %v347 = vunpack.c.l.b16 %v315
        %v348 = vunpack.c.l.b16 %v316
        %v349 = vunpack.c.l.b16 %v317
        %v350 = vunpack.c.l.b16 %v318
        %v351 = vunpack.c.l.b16 %v319
        %v352 = vunpack.c.l.b16 %v320
        %v353 = vunpack.c.l.b16 %v321
        %v354 = vunpack.c.l.b16 %v322
        %v355 = vpack.c.b16 %v348, %v347
        %v356 = vpack.c.b16 %v350, %v349
        %v357 = vpack.c.b16 %v352, %v351
        %v358 = vpack.c.b16 %v354, %v353
        %v379 = vunpack.c.l.b16 %v323
        %v380 = vunpack.c.l.b16 %v324
        %v381 = vunpack.c.l.b16 %v325
        %v382 = vunpack.c.l.b16 %v326
        %v383 = vunpack.c.l.b16 %v327
        %v384 = vunpack.c.l.b16 %v328
        %v385 = vunpack.c.l.b16 %v329
        %v386 = vunpack.c.l.b16 %v330
        %v387 = vunpack.c.l.b16 %v331
        %v388 = vunpack.c.l.b16 %v332
        %v389 = vunpack.c.l.b16 %v333
        %v390 = vunpack.c.l.b16 %v334
        %v391 = vunpack.c.l.b16 %v335
        %v392 = vunpack.c.l.b16 %v336
        %v393 = vunpack.c.l.b16 %v337
        %v394 = vunpack.c.l.b16 %v338
        %v395 = vpack.c.b16 %v380, %v379
        %v396 = vpack.c.b16 %v382, %v381
        %v397 = vpack.c.b16 %v384, %v383
        %v398 = vpack.c.b16 %v386, %v385
        %v399 = vpack.c.b16 %v388, %v387
        %v400 = vpack.c.b16 %v390, %v389
        %v401 = vpack.c.b16 %v392, %v391
        %v402 = vpack.c.b16 %v394, %v393
        %411 = vmatpush.bf16.msra.mxu0 %v402
        %412 = vmatpush.bf16.msra.mxu0 %v401
        %413 = vmatpush.bf16.msra.mxu0 %v400
        %414 = vmatpush.bf16.msra.mxu0 %v399
        %415 = vmatpush.bf16.msra.mxu0 %v398
        %416 = vmatpush.bf16.msra.mxu0 %v397
        %417 = vmatpush.bf16.msra.mxu0 %v396
        %418 = vmatpush.bf16.msra.mxu0 %v395
        %419 = vmatmul.bf16.gmra.mxu0 %v355
        %v420 = vpop.f32.mrf.mxu0
        %v421 = vadd.f32 0.0, %v420
        %v422 = vpop.f32.mrf.mxu0
        %v423 = vadd.f32 0.0, %v422
        %424 = vmatmul.bf16.gmra.mxu0 %v356
        %v425 = vpop.f32.mrf.mxu0
        %v426 = vadd.f32 0.0, %v425
        %v427 = vpop.f32.mrf.mxu0
        %v428 = vadd.f32 0.0, %v427
        %429 = vmatmul.bf16.gmra.mxu0 %v357
        %v430 = vpop.f32.mrf.mxu0
        %v431 = vadd.f32 0.0, %v430
        %v432 = vpop.f32.mrf.mxu0
        %v433 = vadd.f32 0.0, %v432
        %434 = vmatmul.bf16.gmra.mxu0 %v358
        %v435 = vpop.f32.mrf.mxu0
        %v436 = vadd.f32 0.0, %v435
        %v437 = vpop.f32.mrf.mxu0
        %v438 = vadd.f32 0.0, %v437
        %439 = vdwg.mxu0
        %v440 = vadd.f32 %v307, %v421
        %v441 = vadd.f32 %v308, %v423
        %v442 = vadd.f32 %v309, %v426
        %v443 = vadd.f32 %v310, %v428
        %v444 = vadd.f32 %v311, %v431
        %v445 = vadd.f32 %v312, %v433
        %v446 = vadd.f32 %v313, %v436
        %v447 = vadd.f32 %v314, %v438
        %448 = vst [vmem:[#allocation2] sm:$0xff] %v440
        %449 = vst [vmem:[#allocation2 + $0x8] sm:$0xff] %v441
        %450 = vst [vmem:[#allocation2 + $0x10] sm:$0xff] %v442
        %451 = vst [vmem:[#allocation2 + $0x18] sm:$0xff] %v443
        %452 = vst [vmem:[#allocation2 + $0x20] sm:$0xff] %v444
        %453 = vst [vmem:[#allocation2 + $0x28] sm:$0xff] %v445
        %454 = vst [vmem:[#allocation2 + $0x30] sm:$0xff] %v446
        %455 = vst [vmem:[#allocation2 + $0x38] sm:$0xff] %v447
        // Predicated region
        $region45: #{tpu_custom_call.1} parent=27 // pred_check
          %p456 = pneg %p289
        $region46: #{tpu_custom_call.1} parent=27 // pred_check_branch
          %458 = sbr.rel (%p456) target = $region48
        $region47: #{tpu_custom_call.1} parent=27 // pred_region
          %v459 = vld [vmem:[#allocation2] sm:$0xff]
          %v460 = vld [vmem:[#allocation2 + $0x8] sm:$0xff]
          %v461 = vld [vmem:[#allocation2 + $0x10] sm:$0xff]
          %v462 = vld [vmem:[#allocation2 + $0x18] sm:$0xff]
          %v463 = vld [vmem:[#allocation2 + $0x20] sm:$0xff]
          %v464 = vld [vmem:[#allocation2 + $0x28] sm:$0xff]
          %v465 = vld [vmem:[#allocation2 + $0x30] sm:$0xff]
          %v466 = vld [vmem:[#allocation2 + $0x38] sm:$0xff]
          %v467 = vpack.c.bf16 %v459, %v459
          %v468 = vpack.c.bf16 %v460, %v460
          %v469 = vpack.c.bf16 %v461, %v461
          %v470 = vpack.c.bf16 %v462, %v462
          %v471 = vpack.c.bf16 %v463, %v463
          %v472 = vpack.c.bf16 %v464, %v464
          %v473 = vpack.c.bf16 %v465, %v465
          %v474 = vpack.c.bf16 %v466, %v466
          %475 = vst [vmem:[%s276] sm:$0xf] %v467
          %476 = vst [vmem:[%s276 + $0x4] sm:$0xf] %v468
          %477 = vst [vmem:[%s276 + $0x8] sm:$0xf] %v469
          %478 = vst [vmem:[%s276 + $0xc] sm:$0xf] %v470
          %479 = vst [vmem:[%s276 + $0x10] sm:$0xf] %v471
          %480 = vst [vmem:[%s276 + $0x14] sm:$0xf] %v472
          %481 = vst [vmem:[%s276 + $0x18] sm:$0xf] %v473
          %482 = vst [vmem:[%s276 + $0x1c] sm:$0xf] %v474
          %v483 = vld [vmem:[#allocation9] sm:$0xff]
          %v484 = vadd.f32 %v459, %v460
          %v485 = vadd.f32 %v484, %v461
          %v486 = vadd.f32 %v485, %v462
          %v487 = vadd.f32 %v486, %v463
          %v488 = vadd.f32 %v487, %v464
          %v489 = vadd.f32 %v488, %v465
          %v490 = vadd.f32 %v489, %v466
          %v491 = vrot.slane %v490, 4
          %v492 = vadd.f32 %v490, %v491
          %v493 = vrot.slane %v492, 2
          %v494 = vadd.f32 %v492, %v493
          %v495 = vrot.slane %v494, 1
          %v496 = vadd.f32 %v494, %v495
          %v497 = vadd.f32 %v483, %v496
          %498 = vst [vmem:[#allocation9] sm:$0xff] %v497
          %v499 = vld [vmem:[#allocation11] sm:$0xff]
          %v500 = vmul.f32 %v459, %v459
          %v501 = vmul.f32 %v460, %v460
          %v502 = vmul.f32 %v461, %v461
          %v503 = vmul.f32 %v462, %v462
          %v504 = vmul.f32 %v463, %v463
          %v505 = vmul.f32 %v464, %v464
          %v506 = vmul.f32 %v465, %v465
          %v507 = vmul.f32 %v466, %v466
          %v508 = vadd.f32 %v500, %v501
          %v509 = vadd.f32 %v508, %v502
          %v510 = vadd.f32 %v509, %v503
          %v511 = vadd.f32 %v510, %v504
          %v512 = vadd.f32 %v511, %v505
          %v513 = vadd.f32 %v512, %v506
          %v514 = vadd.f32 %v513, %v507
          %v515 = vrot.slane %v514, 4
          %v516 = vadd.f32 %v514, %v515
          %v517 = vrot.slane %v516, 2
          %v518 = vadd.f32 %v516, %v517
          %v519 = vrot.slane %v518, 1
          %v520 = vadd.f32 %v518, %v519
          %v521 = vadd.f32 %v499, %v520
          %522 = vst [vmem:[#allocation11] sm:$0xff] %v521
        $region48: #{tpu_custom_call.1} parent=27 // pred_fallthru
          _
        %s523 = sand.u32 %s113, 1
        %s524 = scalar_lea.sflag [#allocation5], %s523
        %s525 = sand.u32 %s113, 1
        %s526 = smul.addr %s525, 32
        %s527 = scalar_lea.vmem [#allocation8], %s526
        // Predicated region
        $region49: #{tpu_custom_call.1} parent=27 // pred_check
          %p528 = pneg %p123
        $region50: #{tpu_custom_call.1} parent=27 // pred_check_branch
          %530 = sbr.rel (%p528) target = $region52
        $region51: #{tpu_custom_call.1} parent=27 // pred_region
          %s531 = smul.u32 %s29, 2
          %s532 = sadd.s32 %s531, %s30
          %s533 = smul.u32 8, %s532
          %535 = vsyncadd %s524, 0
          %s536 = smul.addr %s533, 4
          %s537 = scalar_lea.hbm %s2, %s536
          %s538 = sshll.u32 %s527, 4
          %s539 = int_to_ptr.vmem [resolvable:$true] %s538
          %s540 = sshll.u32 %s537, 4
          %s541 = int_to_ptr.hbm [resolvable:$true] %s540
          %546 = dma.vmem_to_hbm [thread:$0]  %s539, 512, %s541, %s524, 64, 64, 4
        $region52: #{tpu_custom_call.1} parent=27 // pred_fallthru
          _
        // Predicated region
        $region53: #{tpu_custom_call.1} parent=27 // pred_check
          %p547 = pneg %p149
        $region54: #{tpu_custom_call.1} parent=27 // pred_check_branch
          %549 = sbr.rel (%p547) target = $region56
        $region55: #{tpu_custom_call.1} parent=27 // pred_region
          %551 = vsyncadd [#allocation10], 0
          %s552 = smul.addr %s29, 8
          %s553 = scalar_lea.hbm %s3, %s552
          %s555 = sshll.u32 [#allocation9], 4
          %s556 = int_to_ptr.vmem [resolvable:$true] %s555
          %s557 = sshll.u32 %s553, 4
          %s558 = int_to_ptr.hbm [resolvable:$true] %s557
          %560 = dma.vmem_to_hbm [thread:$0]  %s556, 128, %s558, [#allocation10]
        $region56: #{tpu_custom_call.1} parent=27 // pred_fallthru
          _
        // Predicated region
        $region57: #{tpu_custom_call.1} parent=27 // pred_check
          %p561 = pneg %p175
        $region58: #{tpu_custom_call.1} parent=27 // pred_check_branch
          %563 = sbr.rel (%p561) target = $region60
        $region59: #{tpu_custom_call.1} parent=27 // pred_region
          %565 = vsyncadd [#allocation10], 0
          %s566 = smul.addr %s29, 8
          %s567 = scalar_lea.hbm %s4, %s566
          %s569 = sshll.u32 [#allocation11], 4
          %s570 = int_to_ptr.vmem [resolvable:$true] %s569
          %s571 = sshll.u32 %s567, 4
          %s572 = int_to_ptr.hbm [resolvable:$true] %s571
          %574 = dma.vmem_to_hbm [thread:$0]  %s570, 128, %s572, [#allocation10]
        $region60: #{tpu_custom_call.1} parent=27 // pred_fallthru
          _
        // Predicated region
        $region61: #{tpu_custom_call.1} parent=27 // pred_check
          %p575 = pneg %p149
        $region62: #{tpu_custom_call.1} parent=27 // pred_check_branch
          %577 = sbr.rel (%p575) target = $region64
        $region63: #{tpu_custom_call.1} parent=27 // pred_region
          %579 = dma.done [#allocation10], 128
        $region64: #{tpu_custom_call.1} parent=27 // pred_fallthru
          _
        // Predicated region
        $region65: #{tpu_custom_call.1} parent=27 // pred_check
          %p580 = pneg %p175
        $region66: #{tpu_custom_call.1} parent=27 // pred_check_branch
          %582 = sbr.rel (%p580) target = $region68
        $region67: #{tpu_custom_call.1} parent=27 // pred_region
          %584 = dma.done [#allocation10], 128
        $region68: #{tpu_custom_call.1} parent=27 // pred_fallthru
          _
      $region28: #{tpu_custom_call.1} parent=5 // pred_fallthru
        _
      %p585 = scmp.le.s32.totalorder 2, %s19
      // Predicated region
      $region69: #{tpu_custom_call.1} parent=5 // pred_check
        %p586 = pneg %p585
      $region70: #{tpu_custom_call.1} parent=5 // pred_check_branch
        %588 = sbr.rel (%p586) target = $region72
      $region71: #{tpu_custom_call.1} parent=5 // pred_region
        %s589 = ssub.s32 %s19, 2
        // Predicated region
        $region73: #{tpu_custom_call.1} parent=71 // pred_check
          %p590 = pneg %p129
        $region74: #{tpu_custom_call.1} parent=71 // pred_check_branch
          %592 = sbr.rel (%p590) target = $region76
        $region75: #{tpu_custom_call.1} parent=71 // pred_region
          %s593 = sand.u32 %s114, 1
          %s594 = scalar_lea.sflag [#allocation5], %s593
          %s595 = sand.u32 %s114, 1
          %s596 = smul.addr %s595, 32
          %s597 = scalar_lea.vmem [#allocation8], %s596
          %599 = dma.done %s594, 512
        $region76: #{tpu_custom_call.1} parent=71 // pred_fallthru
          _
      $region72: #{tpu_custom_call.1} parent=5 // pred_fallthru
        _
    $region6: #{tpu_custom_call.1} parent=1 // loop_footer
      %s23 = sadd.s32 1, %s19
    $region7: #{tpu_custom_call.1} parent=1 // loop_footer_branch
      %18 = sbr.rel target = $region3
    $region8: #{tpu_custom_call.1} parent=1 // loop_exit
      _
    %600 = vsyncpa [#allocation4], 1
    %s601 = scalar_lea.sflag [#allocation4], 1
    %602 = vsyncpa %s601, 1
    %603 = vsyncpa [#allocation7], 1
    %604 = vsyncpa [#allocation5], 1
    %s605 = scalar_lea.sflag [#allocation5], 1
    %606 = vsyncpa %s605, 1
    %607 = vsyncpa [#allocation10], 1

</llo_original>
